<compile_context>
chip_gen: v6e
topology: v6e:2x2x1
jax: 0.10.0
libtpu: 0.0.40
codegen_flags: <defaults>
</compile_context>

<pallas_src>
import functools

import jax
import jax.numpy as jnp
from jax import lax
from jax.experimental import pallas as pl
from jax.experimental.pallas import tpu as pltpu


def _round_up(x: int, m: int) -> int:
    return ((x + m - 1) // m) * m


# ----------------------------------------------------------------------------
# Pallas kernel: fused final-LayerNorm + tied LM-head matmul
# ----------------------------------------------------------------------------
def _ln_lm_head_kernel(x_ref, gamma_ref, beta_ref, w_ref, o_ref, xnorm_ref, *, eps):
    """Grid = (token tiles i, vocab tiles j).  j is innermost.

    x_ref     : (TM, H)  bf16 hidden states for token tile i
    gamma_ref : (1, H)   f32 LN scale
    beta_ref  : (1, H)   f32 LN shift
    w_ref     : (H, TN)  bf16 tied LM-head weight tile (pre-transposed [H, V])
    o_ref     : (TM, TN) logits tile (i, j)
    xnorm_ref : (TM, H)  bf16 VMEM scratch caching the normalized activations
    """
    j = pl.program_id(1)

    # LayerNorm hoisted out of the vocab loop: only at j == 0 for each token
    # tile.  Stats in f32 over the full hidden dim, result cached as bf16.
    @pl.when(j == 0)
    def _():
        x = x_ref[...].astype(jnp.float32)                       # (TM, H)
        mean = jnp.mean(x, axis=-1, keepdims=True)
        xc = x - mean
        var = jnp.mean(xc * xc, axis=-1, keepdims=True)
        inv = lax.rsqrt(var + eps)
        g = gamma_ref[...].astype(jnp.float32)                   # (1, H)
        b = beta_ref[...].astype(jnp.float32)                    # (1, H)
        xnorm_ref[...] = (xc * inv * g + b).astype(xnorm_ref.dtype)

    # MXU: bf16 x bf16 -> f32 accumulate, cast only on store.
    o_ref[...] = jnp.dot(
        xnorm_ref[...], w_ref[...], preferred_element_type=jnp.float32
    ).astype(o_ref.dtype)


def layernorm_lm_head(
    hidden,            # (T, H)  bf16 hidden states (T = B*S tokens)
    gamma,             # (1, H)  f32
    beta,              # (1, H)  f32
    w_hv,              # (H, V)  bf16 tied LM-head weight, pre-transposed
    *,
    eps: float = 1e-5,
    logits_dtype=jnp.float32,
    tm: int | None = None,
    tn: int | None = None,
):
    T, H = hidden.shape
    Hw, V = w_hv.shape
    assert Hw == H, "weight must be pre-transposed to [H, V]"
    assert V % 128 == 0, "vocab size must be a multiple of 128 (lane dim)"

    # Tile sizes: token tile (sublane) multiple of 8, vocab tile (lane)
    # multiple of 128 and lane-dense.
    if tm is None:
        tm = min(256, _round_up(T, 8))
    if tn is None:
        tn = next(c for c in (1024, 512, 256, 128) if V % c == 0)
    assert V % tn == 0

    t_pad = _round_up(T, tm)
    if t_pad != T:
        hidden = jnp.pad(hidden, ((0, t_pad - T), (0, 0)))

    grid = (t_pad // tm, V // tn)
    out_bytes = jnp.dtype(logits_dtype).itemsize

    out = pl.pallas_call(
        functools.partial(_ln_lm_head_kernel, eps=eps),
        out_shape=jax.ShapeDtypeStruct((t_pad, V), logits_dtype),
        grid_spec=pltpu.PrefetchScalarGridSpec(
            num_scalar_prefetch=0,
            grid=grid,
            in_specs=[
                pl.BlockSpec((tm, H), lambda i, j: (i, 0)),   # hidden tile
                pl.BlockSpec((1, H), lambda i, j: (0, 0)),    # gamma
                pl.BlockSpec((1, H), lambda i, j: (0, 0)),    # beta
                pl.BlockSpec((H, tn), lambda i, j: (0, j)),   # weight tile
            ],
            out_specs=pl.BlockSpec((tm, tn), lambda i, j: (i, j)),
            scratch_shapes=[pltpu.VMEM((tm, H), jnp.bfloat16)],
        ),
        compiler_params=pltpu.CompilerParams(
            # token axis sharded across TCs (megacore / v7x 2-TC); vocab axis
            # must stay "arbitrary" because the LN scratch is filled at j == 0.
            dimension_semantics=("parallel", "arbitrary"),
            vmem_limit_bytes=48 * 1024 * 1024,   # safe on v7x's 64 MiB VMEM
        ),
        cost_estimate=pl.CostEstimate(
            flops=2 * t_pad * H * V,
            transcendentals=t_pad,
            bytes_accessed=t_pad * H * 2 + H * V * 2 + t_pad * V * out_bytes,
        ),
    )(hidden, gamma, beta, w_hv)

    return out[:T]


# ----------------------------------------------------------------------------
# `inference` implementation + wrapper (JAX analogue of GPTModelWrapper)
# ----------------------------------------------------------------------------
def _gpt_inference(input_ids, wte_b, wpe_b, gamma, beta, w_hv, *,
                   eps, logits_dtype, tm, tn):
    B, S = input_ids.shape
    V, H = wte_b.shape
    # Embedding gather + position add stays in plain XLA, emitted directly in
    # bf16 (no extra full-size cast pass over B*S*H).
    pos = jnp.arange(S, dtype=jnp.int32)
    hidden = (wte_b[input_ids] + wpe_b[pos][None, :, :]).reshape(B * S, H)
    logits = layernorm_lm_head(
        hidden, gamma, beta, w_hv,
        eps=eps, logits_dtype=logits_dtype, tm=tm, tn=tn,
    )
    return logits.reshape(B, S, V)


class GPTModelWrapperTPU:
    """forward(input_ids) -> logits, mirroring GPTModelWrapper.forward.

    (The HF CausalLMOutputWithCrossAttentions container and GenerationMixin
    plumbing are host-side glue; only the logits tensor is produced here.)
    """

    def __init__(self, wte, wpe, ln_gamma, ln_beta, *, eps=1e-5,
                 logits_dtype=jnp.float32, tm=None, tn=None):
        H = wte.shape[1]
        # One-time layout / dtype work (never inside the kernel, never per call):
        self.wte_b = wte.astype(jnp.bfloat16)                       # [V, H]
        self.wpe_b = wpe.astype(jnp.bfloat16)                       # [P, H]
        self.w_hv = jnp.transpose(self.wte_b)                       # tied head, [H, V]
        self.gamma = ln_gamma.astype(jnp.float32).reshape(1, H)
        self.beta = ln_beta.astype(jnp.float32).reshape(1, H)
        self._infer = jax.jit(
            functools.partial(_gpt_inference, eps=float(eps),
                              logits_dtype=logits_dtype, tm=tm, tn=tn)
        )

    def forward(self, input_ids):
        return self._infer(input_ids, self.wte_b, self.wpe_b,
                           self.gamma, self.beta, self.w_hv)

    __call__ = forward


# ----------------------------------------------------------------------------
# Pure-JAX reference (same bf16 quantization points as the kernel path)
# ----------------------------------------------------------------------------
def _reference_forward(input_ids, wte, wpe, gamma, beta, eps):
    B, S = input_ids.shape
    wte_b = wte.astype(jnp.bfloat16)
    wpe_b = wpe.astype(jnp.bfloat16)
    hidden = (wte_b[input_ids] + wpe_b[jnp.arange(S)][None, :, :]).astype(jnp.float32)
    mean = hidden.mean(-1, keepdims=True)
    xc = hidden - mean
    var = (xc * xc).mean(-1, keepdims=True)
    xn = xc * lax.rsqrt(var + eps) * gamma[None, None, :] + beta[None, None, :]
    xn_b = xn.astype(jnp.bfloat16).astype(jnp.float32)
    w = jnp.transpose(wte_b).astype(jnp.float32)                    # [H, V]
    return jnp.einsum("bsh,hv->bsv", xn_b, w)


if __name__ == "__main__":
    B, S, H, V, P = 2, 8, 128, 256, 1024
    key = jax.random.PRNGKey(0)
    k1, k2, k3, k4, k5 = jax.random.split(key, 5)

    wte = 0.02 * jax.random.normal(k1, (V, H), jnp.float32)
    wpe = 0.01 * jax.random.normal(k2, (P, H), jnp.float32)
    ln_gamma = 1.0 + 0.1 * jax.random.normal(k3, (H,), jnp.float32)
    ln_beta = 0.1 * jax.random.normal(k4, (H,), jnp.float32)
    input_ids = jax.random.randint(k5, (B, S), 0, V, dtype=jnp.int32)

    # tn=128 so the demo exercises the multi-vocab-tile path (j > 0 reuses the
    # cached LayerNorm scratch).  Real vocab sizes would default to tn=512+.
    model = GPTModelWrapperTPU(wte, wpe, ln_gamma, ln_beta,
                               eps=1e-5, logits_dtype=jnp.float32, tn=128)

    logits = jax.block_until_ready(model.forward(input_ids))
    assert logits.shape == (B, S, V), logits.shape

    ref = _reference_forward(input_ids, wte, wpe, ln_gamma, ln_beta, 1e-5)
    max_err = float(jnp.max(jnp.abs(logits.astype(jnp.float32) - ref)))
    assert max_err < 2e-2, f"max abs error {max_err}"

    print("KERNEL_OK")
</pallas_src>

<mosaic_0001>
module attributes {stable_mosaic.version = 11 : i64} {
  func.func @_ln_lm_head_kernel(%arg0: i32, %arg1: i32, %arg2: memref<16x128xbf16, #tpu.memory_space<vmem>>, %arg3: memref<1x128xf32, #tpu.memory_space<vmem>>, %arg4: memref<1x128xf32, #tpu.memory_space<vmem>>, %arg5: memref<128x128xbf16, #tpu.memory_space<vmem>>, %arg6: memref<16x128xf32, #tpu.memory_space<vmem>>, %arg7: memref<16x128xbf16, #tpu.memory_space<vmem>>) attributes {dimension_semantics = [#tpu.dimension_semantics<parallel>, #tpu.dimension_semantics<arbitrary>], iteration_bounds = array<i64: 1, 2>, scalar_prefetch = 0 : i64, scratch_operands = 1 : i64, tpu.core_type = #tpu.core_type<tc>, window_params = [{transform_indices = @transform_0, window_bounds = array<i64: 16, 128>}, {pipeline_mode = #tpu.pipeline_mode<synchronous>, transform_indices = @transform_1, window_bounds = array<i64: 1, 128>}, {pipeline_mode = #tpu.pipeline_mode<synchronous>, transform_indices = @transform_2, window_bounds = array<i64: 1, 128>}, {transform_indices = @transform_3, window_bounds = array<i64: 128, 128>}, {transform_indices = @transform_4, window_bounds = array<i64: 16, 128>}]} {
    %c0_i32 = arith.constant 0 : i32
    %0 = arith.cmpi eq, %arg1, %c0_i32 : i32
    %1 = arith.extui %0 : i1 to i32
    %c0_i32_0 = arith.constant 0 : i32
    %2 = arith.cmpi ne, %1, %c0_i32_0 : i32
    scf.if %2 {
      %c0_6 = arith.constant 0 : index
      %c0_7 = arith.constant 0 : index
      %7 = vector.load %arg2[%c0_6, %c0_7] : memref<16x128xbf16, #tpu.memory_space<vmem>>, vector<16x128xbf16>
      %8 = arith.extf %7 : vector<16x128xbf16> to vector<16x128xf32>
      %cst_8 = arith.constant dense<0.000000e+00> : vector<16xf32>
      %9 = vector.multi_reduction <add>, %8, %cst_8 [1] : vector<16x128xf32> to vector<16xf32>
      %10 = vector.shape_cast %9 : vector<16xf32> to vector<16x1xf32>
      %cst_9 = arith.constant 1.280000e+02 : f32
      %11 = vector.broadcast %cst_9 : f32 to vector<16x1xf32>
      %12 = arith.divf %10, %11 : vector<16x1xf32>
      %13 = vector.broadcast %12 : vector<16x1xf32> to vector<16x128xf32>
      %14 = arith.subf %8, %13 : vector<16x128xf32>
      %15 = arith.mulf %14, %14 : vector<16x128xf32>
      %cst_10 = arith.constant dense<0.000000e+00> : vector<16xf32>
      %16 = vector.multi_reduction <add>, %15, %cst_10 [1] : vector<16x128xf32> to vector<16xf32>
      %17 = vector.shape_cast %16 : vector<16xf32> to vector<16x1xf32>
      %cst_11 = arith.constant 1.280000e+02 : f32
      %18 = vector.broadcast %cst_11 : f32 to vector<16x1xf32>
      %19 = arith.divf %17, %18 : vector<16x1xf32>
      %cst_12 = arith.constant 9.99999974E-6 : f32
      %20 = vector.broadcast %cst_12 : f32 to vector<16x1xf32>
      %21 = arith.addf %19, %20 : vector<16x1xf32>
      %22 = math.rsqrt %21 : vector<16x1xf32>
      %c0_13 = arith.constant 0 : index
      %c0_14 = arith.constant 0 : index
      %23 = vector.load %arg3[%c0_13, %c0_14] : memref<1x128xf32, #tpu.memory_space<vmem>>, vector<1x128xf32>
      %c0_15 = arith.constant 0 : index
      %c0_16 = arith.constant 0 : index
      %24 = vector.load %arg4[%c0_15, %c0_16] : memref<1x128xf32, #tpu.memory_space<vmem>>, vector<1x128xf32>
      %25 = vector.broadcast %22 : vector<16x1xf32> to vector<16x128xf32>
      %26 = arith.mulf %14, %25 : vector<16x128xf32>
      %27 = vector.broadcast %23 : vector<1x128xf32> to vector<16x128xf32>
      %28 = arith.mulf %26, %27 : vector<16x128xf32>
      %29 = vector.broadcast %24 : vector<1x128xf32> to vector<16x128xf32>
      %30 = arith.addf %28, %29 : vector<16x128xf32>
      %31 = arith.truncf %30 : vector<16x128xf32> to vector<16x128xbf16>
      %c0_17 = arith.constant 0 : index
      %c0_18 = arith.constant 0 : index
      %32 = vector.load %arg7[%c0_17, %c0_18] : memref<16x128xbf16, #tpu.memory_space<vmem>>, vector<16x128xbf16>
      tpu.vector_store %arg7[%c0_17, %c0_18], %31 {strides = array<i32>} : memref<16x128xbf16, #tpu.memory_space<vmem>>, vector<16x128xbf16>,
    } else {
    }
    %c0 = arith.constant 0 : index
    %c0_1 = arith.constant 0 : index
    %3 = vector.load %arg7[%c0, %c0_1] : memref<16x128xbf16, #tpu.memory_space<vmem>>, vector<16x128xbf16>
    %c0_2 = arith.constant 0 : index
    %c0_3 = arith.constant 0 : index
    %4 = vector.load %arg5[%c0_2, %c0_3] : memref<128x128xbf16, #tpu.memory_space<vmem>>, vector<128x128xbf16>
    %cst = arith.constant dense<0.000000e+00> : vector<16x128xf32>
    %5 = tpu.matmul %3, %4, %cst {dimension_numbers = #tpu.dot_dimension_numbers<[1], [0], [0], [1], [0, 0, 1, 1], [], []>} : vector<16x128xbf16>, vector<128x128xbf16>, vector<16x128xf32> -> vector<16x128xf32>
    %c0_4 = arith.constant 0 : index
    %c0_5 = arith.constant 0 : index
    %6 = vector.load %arg6[%c0_4, %c0_5] : memref<16x128xf32, #tpu.memory_space<vmem>>, vector<16x128xf32>
    tpu.vector_store %arg6[%c0_4, %c0_5], %5 {strides = array<i32>} : memref<16x128xf32, #tpu.memory_space<vmem>>, vector<16x128xf32>,
    return
  }
  func.func @transform_0(%arg0: i32, %arg1: i32) -> (i32, i32) {
    %c0_i32 = arith.constant 0 : i32
    %c0_i32_0 = arith.constant 0 : i32
    return %arg0, %c0_i32 : i32, i32
  }
  func.func @transform_1(%arg0: i32, %arg1: i32) -> (i32, i32) {
    %c0_i32 = arith.constant 0 : i32
    %c0_i32_0 = arith.constant 0 : i32
    %c0_i32_1 = arith.constant 0 : i32
    return %c0_i32, %c0_i32_0 : i32, i32
  }
  func.func @transform_2(%arg0: i32, %arg1: i32) -> (i32, i32) {
    %c0_i32 = arith.constant 0 : i32
    %c0_i32_0 = arith.constant 0 : i32
    %c0_i32_1 = arith.constant 0 : i32
    return %c0_i32, %c0_i32_0 : i32, i32
  }
  func.func @transform_3(%arg0: i32, %arg1: i32) -> (i32, i32) {
    %c0_i32 = arith.constant 0 : i32
    %c0_i32_0 = arith.constant 0 : i32
    return %c0_i32, %arg1 : i32, i32
  }
  func.func @transform_4(%arg0: i32, %arg1: i32) -> (i32, i32) {
    %c0_i32 = arith.constant 0 : i32
    return %arg0, %arg1 : i32, i32
  }
}

</mosaic_0001>

<llo_original>
// kernel: _gpt_inference.1
$region0: #{_gpt_inference.1}
  #allocation0 [shape = 'u32[]', space=smem, size = 0x4, offset = 0x4, fixed_abs, tag = 'smem constant byte address 0x4 - core index']
  #allocation1 [shape = 'u32[144,128]{1,0:T(1,128)}', space=vmem, size = 0x12000, scoped, tag = 'internal scratch']
  #allocation2 [shape = 'bf16[16,128]{1,0:T(8,128)(2,1)}', space=vmem, size = 0x1000, scoped, tag = 'scratch operand']
  %s0 = inlined_call_operand.vmem [shape: bf16[16,128], index: 0, kind: input, shape index: {}]
  %s1 = inlined_call_operand.vmem [shape: f32[1,128], index: 1, kind: input, shape index: {}]
  %s2 = inlined_call_operand.vmem [shape: f32[1,128], index: 2, kind: input, shape index: {}]
  %s3 = inlined_call_operand.vmem [shape: bf16[128,256], index: 3, kind: input, shape index: {}]
  %s4 = inlined_call_operand.hbm [shape: f32[16,256], index: 4, kind: output, shape index: {}]
  %s5 = sld [smem:[#allocation0]]
  $region94: #{_gpt_inference.1} parent=0
    _
  %s7 = ssub.s32 1, %s5
  %s8 = scalar_select 0, %s7, %s5
  $region1: #{_gpt_inference.1} parent=0
    #allocation3 [shape = 'u8[65536]{0}', space=vmem, size = 0x10000, scoped, tag = 'input window, operand 3']
    #allocation4 [shape = 'u8[16384]{0}', space=vmem, size = 0x4000, scoped, tag = 'output window, operand 0']
    #allocation5 [shape = 's32[2]{0}', space=sflag, size = 0x8, scoped, tag = 'scoped memory for _gpt_inference.1']
    %9 = vsyncpa [#allocation5], 0
    %s10 = scalar_lea.sflag [#allocation5], 1
    %11 = vsyncpa %s10, 0
    loop: start=0, step=1, limit=4
    $region2: #{_gpt_inference.1} parent=1 // loop_pre_header
      _
    $region3: #{_gpt_inference.1} parent=1 // loop_header
      %s13 = sphi 0, %s17
      %p14 = scmp.ge.s32.totalorder %s13, 4
      %s20 = sphi 0, %s32
      %s21 = sphi 0, %s28
      %s22 = sphi 0, %s20
      %s23 = sphi 0, %s21
      %s24 = sphi 0, %s22
      %s25 = sphi 0, %s23
      %s35 = sphi 0, %s37
      %s38 = sphi 0, %s35
      %s39 = sphi 0, %s38
      %s55 = sphi 0, %s39
      %s59 = sphi 0, %s59
      %s61 = sphi 0, %s59
      %s62 = sphi 0, %s61
      %s76 = sphi 0, %s62
      %s80 = sphi 0, %s80
      %s82 = sphi 0, %s80
      %s83 = sphi 0, %s82
      %s97 = sphi 0, %s83
      %s103 = sphi 0, %s105
      %s106 = sphi 0, %s103
      %s107 = sphi 0, %s106
      %s123 = sphi 0, %s107
      %s131 = sphi 0, %s133
      %s134 = sphi 0, %s131
      %s135 = sphi 0, %s134
      %s151 = sphi 0, %s135
    $region4: #{_gpt_inference.1} parent=1 // loop_header_branch
      %16 = sbr.rel (%p14) target = $region8
    $region5: #{_gpt_inference.1} parent=1 // loop_body
      %s18 = ssub.s32 %s13, 1
      %s19 = ssub.s32 %s13, 2
      %s26 = sadd.s32 1, %s21
      %p27 = scmp.ge.s32.totalorder %s26, 2
      %s28 = scalar_select %p27, 0, %s26
      %s29 = sadd.s32 1, %s20
      %s30 = scalar_select %p27, %s29, %s20
      %p31 = scmp.ge.s32.totalorder %s30, 1
      %s32 = scalar_select %p31, 0, %s30
      %s33 = ssub.s32 %s20, %s32
      %p34 = scmp.eq.s32.totalorder %s33, 0
      %s36 = sadd.s32 %s35, 1
      %s37 = scalar_select %p34, %s35, %s36
      %p40 = pneg %p34
      %p41 = scmp.eq.s32.totalorder %s13, 1
      %p42 = por %p40, %p41
      %p43 = scmp.ne.s32.totalorder %s35, %s38
      %p44 = scmp.eq.s32.totalorder %s13, 0
      %p45 = por %p43, %p44
      %p46 = scmp.ne.s32.totalorder %s35, %s38
      %p47 = scmp.eq.s32.totalorder %s18, 1
      %p48 = por %p46, %p47
      %p49 = scmp.ne.s32.totalorder %s38, %s39
      %p50 = scmp.eq.s32.totalorder %s18, 0
      %p51 = por %p49, %p50
      %p52 = scmp.ne.s32.totalorder %s38, %s39
      %p53 = scmp.eq.s32.totalorder %s19, 1
      %p54 = por %p52, %p53
      %p56 = scmp.ne.s32.totalorder %s39, %s55
      %p57 = scmp.eq.s32.totalorder %s19, 0
      %p58 = por %p56, %p57
      %s60 = sadd.s32 %s59, 1
      %p63 = scmp.eq.s32.totalorder %s13, 1
      %p64 = scmp.ne.s32.totalorder %s59, %s61
      %p65 = scmp.eq.s32.totalorder %s13, 0
      %p66 = por %p64, %p65
      %p67 = scmp.ne.s32.totalorder %s59, %s61
      %p68 = scmp.eq.s32.totalorder %s18, 1
      %p69 = por %p67, %p68
      %p70 = scmp.ne.s32.totalorder %s61, %s62
      %p71 = scmp.eq.s32.totalorder %s18, 0
      %p72 = por %p70, %p71
      %p73 = scmp.ne.s32.totalorder %s61, %s62
      %p74 = scmp.eq.s32.totalorder %s19, 1
      %p75 = por %p73, %p74
      %p77 = scmp.ne.s32.totalorder %s62, %s76
      %p78 = scmp.eq.s32.totalorder %s19, 0
      %p79 = por %p77, %p78
      %s81 = sadd.s32 %s80, 1
      %p84 = scmp.eq.s32.totalorder %s13, 1
      %p85 = scmp.ne.s32.totalorder %s80, %s82
      %p86 = scmp.eq.s32.totalorder %s13, 0
      %p87 = por %p85, %p86
      %p88 = scmp.ne.s32.totalorder %s80, %s82
      %p89 = scmp.eq.s32.totalorder %s18, 1
      %p90 = por %p88, %p89
      %p91 = scmp.ne.s32.totalorder %s82, %s83
      %p92 = scmp.eq.s32.totalorder %s18, 0
      %p93 = por %p91, %p92
      %p94 = scmp.ne.s32.totalorder %s82, %s83
      %p95 = scmp.eq.s32.totalorder %s19, 1
      %p96 = por %p94, %p95
      %p98 = scmp.ne.s32.totalorder %s83, %s97
      %p99 = scmp.eq.s32.totalorder %s19, 0
      %p100 = por %p98, %p99
      %s101 = ssub.s32 %s21, %s28
      %p102 = scmp.eq.s32.totalorder %s101, 0
      %s104 = sadd.s32 %s103, 1
      %s105 = scalar_select %p102, %s103, %s104
      %p108 = pneg %p102
      %p109 = scmp.eq.s32.totalorder %s13, 1
      %p110 = por %p108, %p109
      %p111 = scmp.ne.s32.totalorder %s103, %s106
      %p112 = scmp.eq.s32.totalorder %s13, 0
      %p113 = por %p111, %p112
      %p114 = scmp.ne.s32.totalorder %s103, %s106
      %p115 = scmp.eq.s32.totalorder %s18, 1
      %p116 = por %p114, %p115
      %p117 = scmp.ne.s32.totalorder %s106, %s107
      %p118 = scmp.eq.s32.totalorder %s18, 0
      %p119 = por %p117, %p118
      %p120 = scmp.ne.s32.totalorder %s106, %s107
      %p121 = scmp.eq.s32.totalorder %s19, 1
      %p122 = por %p120, %p121
      %p124 = scmp.ne.s32.totalorder %s107, %s123
      %p125 = scmp.eq.s32.totalorder %s19, 0
      %p126 = por %p124, %p125
      %s127 = ssub.s32 %s20, %s32
      %s128 = ssub.s32 %s21, %s28
      %s129 = sor.u32 %s127, %s128
      %p130 = scmp.eq.s32.totalorder %s129, 0
      %s132 = sadd.s32 %s131, 1
      %s133 = scalar_select %p130, %s131, %s132
      %p136 = pneg %p130
      %p137 = scmp.eq.s32.totalorder %s13, 1
      %p138 = por %p136, %p137
      %p139 = scmp.ne.s32.totalorder %s131, %s134
      %p140 = scmp.eq.s32.totalorder %s13, 0
      %p141 = por %p139, %p140
      %p142 = scmp.ne.s32.totalorder %s131, %s134
      %p143 = scmp.eq.s32.totalorder %s18, 1
      %p144 = por %p142, %p143
      %p145 = scmp.ne.s32.totalorder %s134, %s135
      %p146 = scmp.eq.s32.totalorder %s18, 0
      %p147 = por %p145, %p146
      %p148 = scmp.ne.s32.totalorder %s134, %s135
      %p149 = scmp.eq.s32.totalorder %s19, 1
      %p150 = por %p148, %p149
      %p152 = scmp.ne.s32.totalorder %s135, %s151
      %p153 = scmp.eq.s32.totalorder %s19, 0
      %p154 = por %p152, %p153
      %p155 = scmp.le.s32.totalorder 1, %s13
      %p156 = scmp.lt.s32.totalorder %s13, 3
      %p157 = pnand %p155, %p156
      %p158 = pneg %p157
      // Predicated region
      $region9: #{_gpt_inference.1} parent=5 // pred_check
        _
      $region10: #{_gpt_inference.1} parent=5 // pred_check_branch
        %160 = sbr.rel (%p157) target = $region12
      $region11: #{_gpt_inference.1} parent=5 // pred_region
        %s161 = ssub.s32 %s13, 1
        // Predicated region
        $region13: #{_gpt_inference.1} parent=11 // pred_check
          %p162 = pneg %p51
        $region14: #{_gpt_inference.1} parent=11 // pred_check_branch
          %164 = sbr.rel (%p162) target = $region16
        $region15: #{_gpt_inference.1} parent=11 // pred_region
          %s165 = smul.u32 2, %s22
          %p166 = scmp.lt.s32.totalorder %s165, 1
          %s167 = scalar_select %p166, %s165, 1
          %s168 = smul.addr %s167, 4
          %s169 = scalar_lea.vmem %s0, %s168
          %s170 = smul.u32 2, %s22
        $region16: #{_gpt_inference.1} parent=11 // pred_fallthru
          _
        // Predicated region
        $region17: #{_gpt_inference.1} parent=11 // pred_check
          %p171 = pneg %p72
        $region18: #{_gpt_inference.1} parent=11 // pred_check_branch
          %173 = sbr.rel (%p171) target = $region20
        $region19: #{_gpt_inference.1} parent=11 // pred_region
          _
        $region20: #{_gpt_inference.1} parent=11 // pred_fallthru
          _
        // Predicated region
        $region21: #{_gpt_inference.1} parent=11 // pred_check
          %p174 = pneg %p93
        $region22: #{_gpt_inference.1} parent=11 // pred_check_branch
          %176 = sbr.rel (%p174) target = $region24
        $region23: #{_gpt_inference.1} parent=11 // pred_region
          _
        $region24: #{_gpt_inference.1} parent=11 // pred_fallthru
          _
      $region12: #{_gpt_inference.1} parent=5 // pred_fallthru
        _
      %p177 = scmp.lt.s32.totalorder %s13, 2
      // Predicated region
      $region25: #{_gpt_inference.1} parent=5 // pred_check
        %p178 = pneg %p177
      $region26: #{_gpt_inference.1} parent=5 // pred_check_branch
        %180 = sbr.rel (%p178) target = $region28
      $region27: #{_gpt_inference.1} parent=5 // pred_region
        // Predicated region
        $region29: #{_gpt_inference.1} parent=27 // pred_check
          %p181 = pneg %p113
        $region30: #{_gpt_inference.1} parent=27 // pred_check_branch
          %183 = sbr.rel (%p181) target = $region32
        $region31: #{_gpt_inference.1} parent=27 // pred_region
          %s184 = sand.u32 %s103, 1
          %s185 = sand.u32 %s103, 1
          %s186 = smul.addr %s185, 64
          %s187 = scalar_lea.vmem [#allocation3], %s186
          %s188 = smul.addr %s21, 4
          %s189 = scalar_lea.vmem %s3, %s188
          // Predicated region
          $region33: #{_gpt_inference.1} parent=31 // pred_check
            _
          $region34: #{_gpt_inference.1} parent=31 // pred_check_branch
            %191 = sbr.rel (0) target = $region36
          $region35: #{_gpt_inference.1} parent=31 // pred_region
            // Predicated region
            $region37: #{_gpt_inference.1} parent=35 // pred_check
              _
            $region38: #{_gpt_inference.1} parent=35 // pred_check_branch
              %193 = sbr.rel target = $region40
            $region39: #{_gpt_inference.1} parent=35 // pred_region
              // Predicated region
              $region52: #{_gpt_inference.1} parent=39 // pred_check
                _
              $region53: #{_gpt_inference.1} parent=39 // pred_check_branch
                %239 = sbr.rel (0) target = $region55
              $region54: #{_gpt_inference.1} parent=39 // pred_region
                loop: start=0, step=1, limit=1
                $region56: #{_gpt_inference.1} parent=54 // loop_pre_header
                  _
                $region57: #{_gpt_inference.1} parent=54 // loop_header
                  %s241 = sphi 0, %s245
                  %p242 = scmp.ge.s32.totalorder %s241, 1
                  %s246 = sphi %s189, %s189
                  %s247 = sphi %s187, %s187
                $region58: #{_gpt_inference.1} parent=54 // loop_header_branch
                  %244 = sbr.rel (%p242) target = $region62
                $region59: #{_gpt_inference.1} parent=54 // loop_body
                  _
                $region60: #{_gpt_inference.1} parent=54 // loop_footer
                  %s245 = sadd.s32 1, %s241
                $region61: #{_gpt_inference.1} parent=54 // loop_footer_branch
                  %240 = sbr.rel target = $region57
                $region62: #{_gpt_inference.1} parent=54 // loop_exit
                  _
                %s249 = ssub.s32 16, 1
                loop: start=0, step=1, limit=1
                $region63: #{_gpt_inference.1} parent=54 // loop_pre_header
                  _
                $region64: #{_gpt_inference.1} parent=54 // loop_header
                  %s251 = sphi 0, %s255
                  %p252 = scmp.ge.s32.totalorder %s251, 1
                  %s256 = sphi %s189, %s189
                  %s257 = sphi %s187, %s187
                $region65: #{_gpt_inference.1} parent=54 // loop_header_branch
                  %254 = sbr.rel (%p252) target = $region69
                $region66: #{_gpt_inference.1} parent=54 // loop_body
                  %v258 = vld [vmem:[%s256] sm:%s249]
                  %259 = vst [vmem:[%s257] sm:%s249] %v258
                  %v260 = vld [vmem:[%s256 + $0x8] sm:%s249]
                  %261 = vst [vmem:[%s257 + $0x4] sm:%s249] %v260
                  %v262 = vld [vmem:[%s256 + $0x10] sm:%s249]
                  %263 = vst [vmem:[%s257 + $0x8] sm:%s249] %v262
                  %v264 = vld [vmem:[%s256 + $0x18] sm:%s249]
                  %265 = vst [vmem:[%s257 + $0xc] sm:%s249] %v264
                  %v266 = vld [vmem:[%s256 + $0x20] sm:%s249]
                  %267 = vst [vmem:[%s257 + $0x10] sm:%s249] %v266
                  %v268 = vld [vmem:[%s256 + $0x28] sm:%s249]
                  %269 = vst [vmem:[%s257 + $0x14] sm:%s249] %v268
                  %v270 = vld [vmem:[%s256 + $0x30] sm:%s249]
                  %271 = vst [vmem:[%s257 + $0x18] sm:%s249] %v270
                  %v272 = vld [vmem:[%s256 + $0x38] sm:%s249]
                  %273 = vst [vmem:[%s257 + $0x1c] sm:%s249] %v272
                  %v274 = vld [vmem:[%s256 + $0x40] sm:%s249]
                  %275 = vst [vmem:[%s257 + $0x20] sm:%s249] %v274
                  %v276 = vld [vmem:[%s256 + $0x48] sm:%s249]
                  %277 = vst [vmem:[%s257 + $0x24] sm:%s249] %v276
                  %v278 = vld [vmem:[%s256 + $0x50] sm:%s249]
                  %279 = vst [vmem:[%s257 + $0x28] sm:%s249] %v278
                  %v280 = vld [vmem:[%s256 + $0x58] sm:%s249]
                  %281 = vst [vmem:[%s257 + $0x2c] sm:%s249] %v280
                  %v282 = vld [vmem:[%s256 + $0x60] sm:%s249]
                  %283 = vst [vmem:[%s257 + $0x30] sm:%s249] %v282
                  %v284 = vld [vmem:[%s256 + $0x68] sm:%s249]
                  %285 = vst [vmem:[%s257 + $0x34] sm:%s249] %v284
                  %v286 = vld [vmem:[%s256 + $0x70] sm:%s249]
                  %287 = vst [vmem:[%s257 + $0x38] sm:%s249] %v286
                  %v288 = vld [vmem:[%s256 + $0x78] sm:%s249]
                  %289 = vst [vmem:[%s257 + $0x3c] sm:%s249] %v288
                $region67: #{_gpt_inference.1} parent=54 // loop_footer
                  %s255 = sadd.s32 1, %s251
                $region68: #{_gpt_inference.1} parent=54 // loop_footer_branch
                  %250 = sbr.rel target = $region64
                $region69: #{_gpt_inference.1} parent=54 // loop_exit
                  _
              $region55: #{_gpt_inference.1} parent=39 // pred_fallthru
                _
            $region40: #{_gpt_inference.1} parent=35 // pred_fallthru
              _
            // Predicated region
            $region41: #{_gpt_inference.1} parent=35 // pred_check
              _
            $region42: #{_gpt_inference.1} parent=35 // pred_check_branch
              %195 = sbr.rel (0) target = $region44
            $region43: #{_gpt_inference.1} parent=35 // pred_region
              %s197 = ssub.s32 16, 1
              loop: start=0, step=1, limit=1
              $region45: #{_gpt_inference.1} parent=43 // loop_pre_header
                _
              $region46: #{_gpt_inference.1} parent=43 // loop_header
                %s199 = sphi 0, %s203
                %p200 = scmp.ge.s32.totalorder %s199, 1
                %s204 = sphi %s189, %s189
                %s205 = sphi %s187, %s187
              $region47: #{_gpt_inference.1} parent=43 // loop_header_branch
                %202 = sbr.rel (%p200) target = $region51
              $region48: #{_gpt_inference.1} parent=43 // loop_body
                %v206 = vld [vmem:[%s204] sm:%s197]
                %207 = vst [vmem:[%s205] sm:%s197] %v206
                %v208 = vld [vmem:[%s204 + $0x8] sm:%s197]
                %209 = vst [vmem:[%s205 + $0x4] sm:%s197] %v208
                %v210 = vld [vmem:[%s204 + $0x10] sm:%s197]
                %211 = vst [vmem:[%s205 + $0x8] sm:%s197] %v210
                %v212 = vld [vmem:[%s204 + $0x18] sm:%s197]
                %213 = vst [vmem:[%s205 + $0xc] sm:%s197] %v212
                %v214 = vld [vmem:[%s204 + $0x20] sm:%s197]
                %215 = vst [vmem:[%s205 + $0x10] sm:%s197] %v214
                %v216 = vld [vmem:[%s204 + $0x28] sm:%s197]
                %217 = vst [vmem:[%s205 + $0x14] sm:%s197] %v216
                %v218 = vld [vmem:[%s204 + $0x30] sm:%s197]
                %219 = vst [vmem:[%s205 + $0x18] sm:%s197] %v218
                %v220 = vld [vmem:[%s204 + $0x38] sm:%s197]
                %221 = vst [vmem:[%s205 + $0x1c] sm:%s197] %v220
                %v222 = vld [vmem:[%s204 + $0x40] sm:%s197]
                %223 = vst [vmem:[%s205 + $0x20] sm:%s197] %v222
                %v224 = vld [vmem:[%s204 + $0x48] sm:%s197]
                %225 = vst [vmem:[%s205 + $0x24] sm:%s197] %v224
                %v226 = vld [vmem:[%s204 + $0x50] sm:%s197]
                %227 = vst [vmem:[%s205 + $0x28] sm:%s197] %v226
                %v228 = vld [vmem:[%s204 + $0x58] sm:%s197]
                %229 = vst [vmem:[%s205 + $0x2c] sm:%s197] %v228
                %v230 = vld [vmem:[%s204 + $0x60] sm:%s197]
                %231 = vst [vmem:[%s205 + $0x30] sm:%s197] %v230
                %v232 = vld [vmem:[%s204 + $0x68] sm:%s197]
                %233 = vst [vmem:[%s205 + $0x34] sm:%s197] %v232
                %v234 = vld [vmem:[%s204 + $0x70] sm:%s197]
                %235 = vst [vmem:[%s205 + $0x38] sm:%s197] %v234
                %v236 = vld [vmem:[%s204 + $0x78] sm:%s197]
                %237 = vst [vmem:[%s205 + $0x3c] sm:%s197] %v236
              $region49: #{_gpt_inference.1} parent=43 // loop_footer
                %s203 = sadd.s32 1, %s199
              $region50: #{_gpt_inference.1} parent=43 // loop_footer_branch
                %198 = sbr.rel target = $region46
              $region51: #{_gpt_inference.1} parent=43 // loop_exit
                _
            $region44: #{_gpt_inference.1} parent=35 // pred_fallthru
              _
          $region36: #{_gpt_inference.1} parent=31 // pred_fallthru
            _
          %290 = vnop
        $region32: #{_gpt_inference.1} parent=27 // pred_fallthru
          _
      $region28: #{_gpt_inference.1} parent=5 // pred_fallthru
        _
      %p291 = scmp.le.s32.totalorder 1, %s13
      %p292 = scmp.lt.s32.totalorder %s13, 3
      %p293 = pnand %p291, %p292
      %p294 = pneg %p293
      // Predicated region
      $region70: #{_gpt_inference.1} parent=5 // pred_check
        _
      $region71: #{_gpt_inference.1} parent=5 // pred_check_branch
        %296 = sbr.rel (%p293) target = $region73
      $region72: #{_gpt_inference.1} parent=5 // pred_region
        %s297 = ssub.s32 %s13, 1
        %s298 = sand.u32 %s106, 1
        %s299 = sand.u32 %s106, 1
        %s300 = smul.addr %s299, 64
        %s301 = scalar_lea.vmem [#allocation3], %s300
        // Predicated region
        $region74: #{_gpt_inference.1} parent=72 // pred_check
          %p302 = pneg %p119
        $region75: #{_gpt_inference.1} parent=72 // pred_check_branch
          %304 = sbr.rel (%p302) target = $region77
        $region76: #{_gpt_inference.1} parent=72 // pred_region
          _
        $region77: #{_gpt_inference.1} parent=72 // pred_fallthru
          _
        %s305 = smul.u32 2, %s22
        %p306 = scmp.lt.s32.totalorder %s305, 1
        %s307 = scalar_select %p306, %s305, 1
        %s308 = smul.addr %s307, 4
        %s309 = scalar_lea.vmem %s0, %s308
        %p310 = pneg %p51
        %p311 = pneg %p48
        %p312 = pneg %p72
        %p313 = pneg %p69
        %p314 = pneg %p93
        %p315 = pneg %p90
        %s316 = sand.u32 %s106, 1
        %s317 = sand.u32 %s106, 1
        %s318 = smul.addr %s317, 64
        %s319 = scalar_lea.vmem [#allocation3], %s318
        %p320 = pneg %p119
        %p321 = pneg %p116
        %p322 = pneg %p147
        %p323 = pneg %p144
        %s324 = sand.u32 %s134, 1
        %s325 = scalar_lea.sflag [#allocation5], %s324
        %s326 = sand.u32 %s134, 1
        %s327 = smul.addr %s326, 16
        %s328 = scalar_lea.vmem [#allocation4], %s327
        %s329 = smul.u32 2, %s22
        %p330 = scmp.lt.s32.totalorder %s329, 1
        %s331 = scalar_select %p330, %s329, 1
        %s332 = smul.addr %s331, 4
        %s333 = scalar_lea.vmem %s0, %s332
        %s334 = smul.u32 2, %s22
        %s335 = smul.u32 2, %s22
        %p337 = scmp.eq.s32.totalorder %s23, 0
        // Predicated region
        $region78: #{_gpt_inference.1} parent=72 // pred_check
          %p338 = pneg %p337
        $region79: #{_gpt_inference.1} parent=72 // pred_check_branch
          %340 = sbr.rel (%p338) target = $region81
        $region80: #{_gpt_inference.1} parent=72 // pred_region
          %v341 = vld [vmem:[%s333] sm:$0xf]
          %v342 = vld [vmem:[%s333 + $0x4] sm:$0xf]
          %v343 = vunpack.c.l.bf16 %v341
          %v344 = vunpack.c.l.bf16 %v342
          %345 = vadd.xlane.f32.xlu0 %v343
          %v346 = vpop.xlane.xlu0 %345
          %347 = vadd.xlane.f32.xlu0 %v344
          %v348 = vpop.xlane.xlu0 %347
          %v349 = vrcp.pop 128.0
          %v350 = vmul.f32 %v346, %v349
          %v351 = vmul.f32 %v348, %v349
          %v352 = vsub.f32 %v343, %v350
          %v353 = vsub.f32 %v344, %v351
          %v354 = vmul.f32 %v352, %v352
          %v355 = vmul.f32 %v353, %v353
          %356 = vadd.xlane.f32.xlu0 %v354
          %v357 = vpop.xlane.xlu0 %356
          %358 = vadd.xlane.f32.xlu0 %v355
          %v359 = vpop.xlane.xlu0 %358
          %v360 = vmul.f32 %v357, %v349
          %v361 = vmul.f32 %v359, %v349
          %v362 = vadd.f32 %v360, 1e-05
          %v363 = vadd.f32 %v361, 1e-05
          %v364 = vrsqrt.pop %v362
          %v365 = vrsqrt.pop %v363
          %v366 = vld [vmem:[%s1] sm:$0x1]
          %v367 = vld [vmem:[%s2] sm:$0x1]
          %v368 = vmul.f32 %v352, %v364
          %v369 = vmul.f32 %v353, %v365
          %v371 = vlaneseq
          %v372 = vshrl.u32 %v371, 7
          %v373 = vsub.s32 0, %v372
          %v374 = vrot.slane %v366, %v373
          %v376 = vmul.f32 %v368, %v374
          %v377 = vmul.f32 %v369, %v374
          %v379 = vlaneseq
          %v380 = vshrl.u32 %v379, 7
          %v381 = vsub.s32 0, %v380
          %v382 = vrot.slane %v367, %v381
          %v384 = vadd.f32 %v376, %v382
          %v385 = vadd.f32 %v377, %v382
          %v386 = vpack.c.bf16 %v385, %v384
          %v388 = vunpack.c.l.b16 %v386
          %v389 = vunpack.c.h.b16 %v386
          %v390 = vpack.c.b16 %v388, %v388
          %v391 = vpack.c.b16 %v389, %v389
          %394 = vst [vmem:[#allocation2] sm:$0xf] %v390
          %395 = vst [vmem:[#allocation2 + $0x4] sm:$0xf] %v391
        $region81: #{_gpt_inference.1} parent=72 // pred_fallthru
          _
        %v396 = vld [vmem:[#allocation2] sm:$0xf]
        %v397 = vld [vmem:[#allocation2 + $0x4] sm:$0xf]
        %v398 = vld [vmem:[%s301] sm:$0xf]
        %v399 = vld [vmem:[%s301 + $0x4] sm:$0xf]
        %v400 = vld [vmem:[%s301 + $0x8] sm:$0xf]
        %v401 = vld [vmem:[%s301 + $0xc] sm:$0xf]
        %v402 = vld [vmem:[%s301 + $0x10] sm:$0xf]
        %v403 = vld [vmem:[%s301 + $0x14] sm:$0xf]
        %v404 = vld [vmem:[%s301 + $0x18] sm:$0xf]
        %v405 = vld [vmem:[%s301 + $0x1c] sm:$0xf]
        %v406 = vld [vmem:[%s301 + $0x20] sm:$0xf]
        %v407 = vld [vmem:[%s301 + $0x24] sm:$0xf]
        %v408 = vld [vmem:[%s301 + $0x28] sm:$0xf]
        %v409 = vld [vmem:[%s301 + $0x2c] sm:$0xf]
        %v410 = vld [vmem:[%s301 + $0x30] sm:$0xf]
        %v411 = vld [vmem:[%s301 + $0x34] sm:$0xf]
        %v412 = vld [vmem:[%s301 + $0x38] sm:$0xf]
        %v413 = vld [vmem:[%s301 + $0x3c] sm:$0xf]
        %v416 = vunpack.c.l.b16 %v396
        %v417 = vunpack.c.l.b16 %v397
        %v418 = vpack.c.b16 %v417, %v416
        %v436 = vunpack.c.l.b16 %v398
        %v437 = vunpack.c.l.b16 %v399
        %v438 = vunpack.c.l.b16 %v400
        %v439 = vunpack.c.l.b16 %v401
        %v440 = vunpack.c.l.b16 %v402
        %v441 = vunpack.c.l.b16 %v403
        %v442 = vunpack.c.l.b16 %v404
        %v443 = vunpack.c.l.b16 %v405
        %v444 = vunpack.c.l.b16 %v406
        %v445 = vunpack.c.l.b16 %v407
        %v446 = vunpack.c.l.b16 %v408
        %v447 = vunpack.c.l.b16 %v409
        %v448 = vunpack.c.l.b16 %v410
        %v449 = vunpack.c.l.b16 %v411
        %v450 = vunpack.c.l.b16 %v412
        %v451 = vunpack.c.l.b16 %v413
        %v452 = vpack.c.b16 %v437, %v436
        %v453 = vpack.c.b16 %v439, %v438
        %v454 = vpack.c.b16 %v441, %v440
        %v455 = vpack.c.b16 %v443, %v442
        %v456 = vpack.c.b16 %v445, %v444
        %v457 = vpack.c.b16 %v447, %v446
        %v458 = vpack.c.b16 %v449, %v448
        %v459 = vpack.c.b16 %v451, %v450
        %468 = vmatprep.subr.bf16.mxu0 0
        %469 = vmatpush1.bf16.msra.mxu0 %v459
        %470 = vmatprep.subr.bf16.mxu0 0
        %471 = vmatpush1.bf16.msra.mxu0 %v458
        %472 = vmatprep.subr.bf16.mxu0 0
        %473 = vmatpush1.bf16.msra.mxu0 %v457
        %474 = vmatprep.subr.bf16.mxu0 0
        %475 = vmatpush1.bf16.msra.mxu0 %v456
        %476 = vmatprep.subr.bf16.mxu0 0
        %477 = vmatpush1.bf16.msra.mxu0 %v455
        %478 = vmatprep.subr.bf16.mxu0 0
        %479 = vmatpush1.bf16.msra.mxu0 %v454
        %480 = vmatprep.subr.bf16.mxu0 0
        %481 = vmatpush1.bf16.msra.mxu0 %v453
        %482 = vmatprep.subr.bf16.mxu0 0
        %483 = vmatpush1.bf16.msra.mxu0 %v452
        %484 = vmatprep.subr.bf16.mxu0 0
        %485 = vmatpush2.bf16.msra.mxu0 0
        %486 = vmatprep.subr.bf16.mxu0 0
        %487 = vmatpush2.bf16.msra.mxu0 0
        %488 = vmatprep.subr.bf16.mxu0 0
        %489 = vmatpush2.bf16.msra.mxu0 0
        %490 = vmatprep.subr.bf16.mxu0 0
        %491 = vmatpush2.bf16.msra.mxu0 0
        %492 = vmatprep.subr.bf16.mxu0 0
        %493 = vmatpush2.bf16.msra.mxu0 0
        %494 = vmatprep.subr.bf16.mxu0 0
        %495 = vmatpush2.bf16.msra.mxu0 0
        %496 = vmatprep.subr.bf16.mxu0 0
        %497 = vmatpush2.bf16.msra.mxu0 0
        %498 = vmatprep.subr.bf16.mxu0 0
        %499 = vmatpush2.bf16.msra.mxu0 0
        %500 = vmatprep.mubr.bf16.mxu0 0
        %501 = vmatmul.mubr.bf16.gmra.mxu0 %v418
        %v502 = vpop.f32.mrf.mxu0
        %v503 = vadd.f32 0.0, %v502
        %v504 = vpop.f32.mrf.mxu0
        %v505 = vpop.f32.mrf.mxu0
        %v506 = vadd.f32 0.0, %v505
        %v507 = vpop.f32.mrf.mxu0
        %508 = vdwg.mxu0
        %509 = vst [vmem:[%s328] sm:$0xff] %v503
        %510 = vst [vmem:[%s328 + $0x8] sm:$0xff] %v506
        %s511 = sand.u32 %s134, 1
        %s512 = scalar_lea.sflag [#allocation5], %s511
        %s513 = sand.u32 %s134, 1
        %s514 = smul.addr %s513, 16
        %s515 = scalar_lea.vmem [#allocation4], %s514
        // Predicated region
        $region82: #{_gpt_inference.1} parent=72 // pred_check
          %p516 = pneg %p144
        $region83: #{_gpt_inference.1} parent=72 // pred_check_branch
          %518 = sbr.rel (%p516) target = $region85
        $region84: #{_gpt_inference.1} parent=72 // pred_region
          %s519 = smul.u32 2, %s22
          %s521 = ssub.s32 256, 256
          %522 = vsyncadd %s512, %s521
          %s523 = smul.addr %s519, 2
          %s524 = sadd.s32 %s23, %s523
          %s525 = smul.addr %s524, 128
          %s526 = scalar_lea.hbm %s4, %s525
          %s527 = sshll.u32 %s515, 4
          %s528 = int_to_ptr.vmem [resolvable:$true] %s527
          %533 = dma.vmem_to_hbm [thread:$0]  %s528, 256, %s526, %s512, 128, 256, 8
        $region85: #{_gpt_inference.1} parent=72 // pred_fallthru
          _
      $region73: #{_gpt_inference.1} parent=5 // pred_fallthru
        _
      %p534 = scmp.le.s32.totalorder 2, %s13
      // Predicated region
      $region86: #{_gpt_inference.1} parent=5 // pred_check
        %p535 = pneg %p534
      $region87: #{_gpt_inference.1} parent=5 // pred_check_branch
        %537 = sbr.rel (%p535) target = $region89
      $region88: #{_gpt_inference.1} parent=5 // pred_region
        %s538 = ssub.s32 %s13, 2
        // Predicated region
        $region90: #{_gpt_inference.1} parent=88 // pred_check
          %p539 = pneg %p150
        $region91: #{_gpt_inference.1} parent=88 // pred_check_branch
          %541 = sbr.rel (%p539) target = $region93
        $region92: #{_gpt_inference.1} parent=88 // pred_region
          %s542 = sand.u32 %s135, 1
          %s543 = scalar_lea.sflag [#allocation5], %s542
          %s544 = sand.u32 %s135, 1
          %s545 = smul.addr %s544, 16
          %s546 = scalar_lea.vmem [#allocation4], %s545
          %547 = dma.done %s543, 256
        $region93: #{_gpt_inference.1} parent=88 // pred_fallthru
          _
      $region89: #{_gpt_inference.1} parent=5 // pred_fallthru
        _
    $region6: #{_gpt_inference.1} parent=1 // loop_footer
      %s17 = sadd.s32 1, %s13
    $region7: #{_gpt_inference.1} parent=1 // loop_footer_branch
      %12 = sbr.rel target = $region3
    $region8: #{_gpt_inference.1} parent=1 // loop_exit
      _
    %548 = vsyncpa [#allocation5], 1
    %s549 = scalar_lea.sflag [#allocation5], 1
    %550 = vsyncpa %s549, 1

</llo_original>
